<compile_context>
chip_gen: v7x
topology: tpu7x:2x2x1
jax: 0.10.0
libtpu: 0.0.40
codegen_flags: <defaults>
</compile_context>

<pallas_src>
import jax
import jax.numpy as jnp
import numpy as np
from jax.experimental import pallas as pl
from jax.experimental.pallas import tpu as pltpu


def _geometry_head_kernel(counts_ref, x_ref, gamma_ref, beta_ref, w_ref, b_ref,
                          out_ref, sum_ref, sq_ref, scale_ref, shift_ref):
    # x_ref:   [b_tile, C_in, m_tile]  channels-first, M tile on the lane axis
    # gamma/beta: [C_in, 1]   w_ref: [C_out, C_in]   b_ref: [C_out, 1]
    # out_ref: [b_tile, C_out, m_tile]
    # scratch: sum/sq/scale/shift  [b_tile, C_in, 1]  (persist across phase/M axes)
    b_blk = pl.program_id(0)
    phase = pl.program_id(1)
    m_idx = pl.program_id(2)
    b_tile, c_in, m_tile = x_ref.shape

    # global point index of every lane in this M tile; reused for both masks
    col = jax.lax.broadcasted_iota(jnp.int32, (1, m_tile), 1) + m_idx * m_tile

    # ---------------- phase 0: accumulate per-instance sum / sum-of-squares ----
    @pl.when(jnp.logical_and(phase == 0, m_idx == 0))
    def _():
        sum_ref[...] = jnp.zeros_like(sum_ref)
        sq_ref[...] = jnp.zeros_like(sq_ref)

    @pl.when(phase == 0)
    def _():
        def stats_body(bi, carry):
            cnt = counts_ref[b_blk * b_tile + bi]
            xm = jnp.where(col < cnt, x_ref[bi].astype(jnp.float32), 0.0)
            sum_ref[bi] = sum_ref[bi] + jnp.sum(xm, axis=1, keepdims=True)
            sq_ref[bi] = sq_ref[bi] + jnp.sum(xm * xm, axis=1, keepdims=True)
            return carry
        jax.lax.fori_loop(0, b_tile, stats_body, 0)

    # ------- phase 1 entry: finalize stats into one fused affine per instance --
    @pl.when(jnp.logical_and(phase == 1, m_idx == 0))
    def _():
        gamma = gamma_ref[...]
        beta = beta_ref[...]

        def finalize_body(bi, carry):
            cnt = counts_ref[b_blk * b_tile + bi]
            inv_n = 1.0 / jnp.maximum(cnt, 1).astype(jnp.float32)
            mean = sum_ref[bi] * inv_n
            var = sq_ref[bi] * inv_n - mean * mean
            scale = jax.lax.rsqrt(var + 1e-8) * gamma      # [C_in, 1]
            scale_ref[bi] = scale
            shift_ref[bi] = beta - mean * scale
            return carry
        jax.lax.fori_loop(0, b_tile, finalize_body, 0, unroll=True)

    # -------- phase 1: normalize -> ReLU -> pointwise conv -> masked store -----
    @pl.when(phase == 1)
    def _():
        w = w_ref[...]          # hoisted: weights stay resident across instances
        bias = b_ref[...]

        def apply_body(bi, carry):
            cnt = counts_ref[b_blk * b_tile + bi]
            xf = x_ref[bi].astype(jnp.float32)                       # [C_in, m_tile]
            y = jnp.maximum(xf * scale_ref[bi] + shift_ref[bi], 0.0)  # fused IN + ReLU
            out = jnp.dot(w, y, preferred_element_type=jnp.float32) + bias
            out_ref[bi] = jnp.where(col < cnt, out, 0.0).astype(out_ref.dtype)
            return carry
        jax.lax.fori_loop(0, b_tile, apply_body, 0)


def geometry_head_sparse(x, counts, gamma, beta, weight, bias, *,
                         b_tile=1, m_tile=None,
                         vmem_budget_bytes=40 * 1024 * 1024):
    """x: [B, C_in, M] channels-first packed sparse features (M ideally a multiple
    of 128), counts: [B] int32 valid points per instance.  Returns [B, C_out, M]."""
    B, c_in, M = x.shape
    c_out = weight.shape[0]

    # batch tiling: keep >=2 batch blocks when possible so the 'parallel' axis
    # actually shards across both v7x TensorCores.
    b_tile = max(1, min(b_tile, B))
    if B >= 2:
        b_tile = min(b_tile, -(-B // 2))
    n_bblk = -(-B // b_tile)
    B_pad = n_bblk * b_tile

    # M tile: lane-dense (multiple of 128), whole M if it fits the VMEM budget
    # (sized for v7x's 64 MiB VMEM with headroom: double-buffered x + out blocks).
    M_pad = max(128, -(-M // 128) * 128)
    if m_tile is None:
        per_lane_bytes = 2 * b_tile * (c_in + c_out) * 4
        m_tile = (vmem_budget_bytes // per_lane_bytes) // 128 * 128
    m_tile = int(max(128, min(m_tile, M_pad)))
    n_mtiles = -(-M_pad // m_tile)
    M_pad = n_mtiles * m_tile

    # Only pad if the caller did not already provide an aligned persistent layout
    # (the demo below uses aligned shapes, so this path adds no HBM traffic).
    if (B_pad, M_pad) != (B, M):
        x = jnp.pad(x, ((0, B_pad - B), (0, 0), (0, M_pad - M)))
    counts_p = counts.astype(jnp.int32)
    if B_pad != B:
        counts_p = jnp.pad(counts_p, (0, B_pad - B))

    gamma2d = gamma.reshape(c_in, 1)
    beta2d = beta.reshape(c_in, 1)
    bias2d = bias.reshape(c_out, 1)

    grid_spec = pltpu.PrefetchScalarGridSpec(
        num_scalar_prefetch=1,                       # counts -> SMEM
        grid=(n_bblk, 2, n_mtiles),                  # (batch blocks, phase, M tiles)
        in_specs=[
            pl.BlockSpec((b_tile, c_in, m_tile), lambda b, p, m, cnts: (b, 0, m)),
            pl.BlockSpec((c_in, 1), lambda b, p, m, cnts: (0, 0)),
            pl.BlockSpec((c_in, 1), lambda b, p, m, cnts: (0, 0)),
            pl.BlockSpec((c_out, c_in), lambda b, p, m, cnts: (0, 0)),
            pl.BlockSpec((c_out, 1), lambda b, p, m, cnts: (0, 0)),
        ],
        # phase 0 pins the output index at (b, 0, 0) so nothing is written back
        # until phase 1 has fully computed each tile.
        out_specs=pl.BlockSpec((b_tile, c_out, m_tile),
                               lambda b, p, m, cnts: (b, 0, p * m)),
        scratch_shapes=[
            pltpu.VMEM((b_tile, c_in, 1), jnp.float32),   # sum
            pltpu.VMEM((b_tile, c_in, 1), jnp.float32),   # sum of squares
            pltpu.VMEM((b_tile, c_in, 1), jnp.float32),   # fused scale
            pltpu.VMEM((b_tile, c_in, 1), jnp.float32),   # fused shift
        ],
    )

    out = pl.pallas_call(
        _geometry_head_kernel,
        out_shape=jax.ShapeDtypeStruct((B_pad, c_out, M_pad), x.dtype),
        grid_spec=grid_spec,
        compiler_params=pltpu.CompilerParams(
            dimension_semantics=("parallel", "arbitrary", "arbitrary"),
            vmem_limit_bytes=48 * 1024 * 1024,
        ),
    )(counts_p, x, gamma2d, beta2d, weight, bias2d)

    if (B_pad, M_pad) != (B, M):
        out = out[:B, :, :M]
    return out


def _reference(x, counts, gamma, beta, weight, bias):
    # channels-first reference: x [B, C_in, M]
    B, c_in, M = x.shape
    mask = jnp.arange(M)[None, None, :] < counts[:, None, None]
    n = jnp.maximum(counts, 1).astype(jnp.float32)[:, None, None]
    xm = jnp.where(mask, x, 0.0)
    mean = jnp.sum(xm, axis=2, keepdims=True) / n
    centered = jnp.where(mask, x - mean, 0.0)
    var = jnp.sum(centered * centered, axis=2, keepdims=True) / n
    normed = (x - mean) * jax.lax.rsqrt(var + 1e-8)
    y = jnp.maximum(normed * gamma[None, :, None] + beta[None, :, None], 0.0)
    out = jnp.einsum("oc,bcm->bom", weight, y) + bias[None, :, None]
    return jnp.where(mask, out, 0.0)


if __name__ == "__main__":
    # small synthetic shapes consistent with the module
    B = 2               # 2 batch instances
    M = 256             # point capacity per instance (multiple of 128 -> no padding)
    C_IN, C_OUT = 32, 16
    TRUNCATION = 3      # stored by the module but unused in forward
    NUM_BLOCKS = 0      # SparseBasicBlocks not translated (see TODO above)

    key = jax.random.PRNGKey(0)
    kx, kw, kb = jax.random.split(key, 3)

    counts = jnp.array([256, 173], dtype=jnp.int32)
    x = jax.random.normal(kx, (B, C_IN, M), dtype=jnp.float32)
    # zero out padded points (packed-sparse convention; they are masked anyway)
    x = x * (jnp.arange(M)[None, None, :] < counts[:, None, None]).astype(jnp.float32)

    gamma = jnp.ones((C_IN,), dtype=jnp.float32)        # InstanceNorm weight
    beta = jnp.zeros((C_IN,), dtype=jnp.float32)        # InstanceNorm bias
    bound = 1.0 / np.sqrt(C_IN)
    weight = jax.random.uniform(kw, (C_OUT, C_IN), minval=-bound, maxval=bound,
                                dtype=jnp.float32)      # conv center-tap weight [out, in]
    bias = jax.random.uniform(kb, (C_OUT,), minval=-bound, maxval=bound,
                              dtype=jnp.float32)        # conv bias

    # m_tile=128 forces n_mtiles=2 so the two-phase M-tiled accumulation path is
    # exercised; b_tile defaults to 1 so the grid has >=2 batch blocks.
    out = geometry_head_sparse(x, counts, gamma, beta, weight, bias, m_tile=128)
    out = jax.block_until_ready(out)

    ref = _reference(x, counts, gamma, beta, weight, bias)
    np.testing.assert_allclose(np.asarray(out), np.asarray(ref), rtol=1e-3, atol=1e-3)

    print("KERNEL_OK")
</pallas_src>

<mosaic_0001>
module attributes {stable_mosaic.version = 11 : i64} {
  func.func @_geometry_head_kernel(%arg0: i32, %arg1: i32, %arg2: i32, %arg3: memref<2xi32, #tpu.memory_space<smem>>, %arg4: memref<1x32x128xf32, #tpu.memory_space<vmem>>, %arg5: memref<32x1xf32, #tpu.memory_space<vmem>>, %arg6: memref<32x1xf32, #tpu.memory_space<vmem>>, %arg7: memref<16x32xf32, #tpu.memory_space<vmem>>, %arg8: memref<16x1xf32, #tpu.memory_space<vmem>>, %arg9: memref<1x16x128xf32, #tpu.memory_space<vmem>>, %arg10: memref<1x32x1xf32, #tpu.memory_space<vmem>>, %arg11: memref<1x32x1xf32, #tpu.memory_space<vmem>>, %arg12: memref<1x32x1xf32, #tpu.memory_space<vmem>>, %arg13: memref<1x32x1xf32, #tpu.memory_space<vmem>>) attributes {dimension_semantics = [#tpu.dimension_semantics<parallel>, #tpu.dimension_semantics<arbitrary>, #tpu.dimension_semantics<arbitrary>], iteration_bounds = array<i64: 2, 2, 2>, scalar_prefetch = 1 : i64, scratch_operands = 4 : i64, tpu.core_type = #tpu.core_type<tc>, window_params = [{transform_indices = @transform_0, window_bounds = array<i64: 1, 32, 128>}, {pipeline_mode = #tpu.pipeline_mode<synchronous>, transform_indices = @transform_1, window_bounds = array<i64: 32, 1>}, {pipeline_mode = #tpu.pipeline_mode<synchronous>, transform_indices = @transform_2, window_bounds = array<i64: 32, 1>}, {pipeline_mode = #tpu.pipeline_mode<synchronous>, transform_indices = @transform_3, window_bounds = array<i64: 16, 32>}, {pipeline_mode = #tpu.pipeline_mode<synchronous>, transform_indices = @transform_4, window_bounds = array<i64: 16, 1>}, {transform_indices = @transform_5, window_bounds = array<i64: 1, 16, 128>}]} {
    %0 = tpu.iota {dimensions = array<i32: 1>} : vector<1x128xi32>
    %c128_i32 = arith.constant 128 : i32
    %1 = arith.muli %arg2, %c128_i32 : i32
    %2 = vector.broadcast %1 : i32 to vector<1x128xi32>
    %3 = arith.addi %0, %2 : vector<1x128xi32>
    %c0_i32 = arith.constant 0 : i32
    %4 = arith.cmpi eq, %arg1, %c0_i32 : i32
    %c0_i32_0 = arith.constant 0 : i32
    %5 = arith.cmpi eq, %arg2, %c0_i32_0 : i32
    %6 = arith.andi %4, %5 : i1
    %7 = arith.extui %6 : i1 to i32
    %c0_i32_1 = arith.constant 0 : i32
    %8 = arith.cmpi ne, %7, %c0_i32_1 : i32
    scf.if %8 {
      %cst = arith.constant 0.000000e+00 : f32
      %20 = vector.broadcast %cst : f32 to vector<1x32x1xf32>
      %c0 = arith.constant 0 : index
      %c0_8 = arith.constant 0 : index
      %c0_9 = arith.constant 0 : index
      %21 = vector.load %arg10[%c0, %c0_8, %c0_9] : memref<1x32x1xf32, #tpu.memory_space<vmem>>, vector<1x32x1xf32>
      tpu.vector_store %arg10[%c0, %c0_8, %c0_9], %20 {strides = array<i32>} : memref<1x32x1xf32, #tpu.memory_space<vmem>>, vector<1x32x1xf32>,
      %cst_10 = arith.constant 0.000000e+00 : f32
      %22 = vector.broadcast %cst_10 : f32 to vector<1x32x1xf32>
      %c0_11 = arith.constant 0 : index
      %c0_12 = arith.constant 0 : index
      %c0_13 = arith.constant 0 : index
      %23 = vector.load %arg11[%c0_11, %c0_12, %c0_13] : memref<1x32x1xf32, #tpu.memory_space<vmem>>, vector<1x32x1xf32>
      tpu.vector_store %arg11[%c0_11, %c0_12, %c0_13], %22 {strides = array<i32>} : memref<1x32x1xf32, #tpu.memory_space<vmem>>, vector<1x32x1xf32>,
    } else {
    }
    %c0_i32_2 = arith.constant 0 : i32
    %9 = arith.cmpi eq, %arg1, %c0_i32_2 : i32
    %10 = arith.extui %9 : i1 to i32
    %c0_i32_3 = arith.constant 0 : i32
    %11 = arith.cmpi ne, %10, %c0_i32_3 : i32
    scf.if %11 {
      %c0_i32_8 = arith.constant 0 : i32
      %c1_i32_9 = arith.constant 1 : i32
      %20 = arith.muli %arg0, %c1_i32_9 : i32
      %21 = arith.addi %20, %c0_i32_8 : i32
      %22 = arith.index_cast %21 : i32 to index
      %23 = memref.load %arg3[%22] : memref<2xi32, #tpu.memory_space<smem>>
      %24 = vector.broadcast %23 : i32 to vector<1x128xi32>
      %25 = arith.cmpi slt, %3, %24 : vector<1x128xi32>
      %26 = arith.index_cast %c0_i32_8 : i32 to index
      %c0 = arith.constant 0 : index
      %c0_10 = arith.constant 0 : index
      %27 = vector.load %arg4[%26, %c0, %c0_10] : memref<1x32x128xf32, #tpu.memory_space<vmem>>, vector<1x32x128xf32>
      %28 = vector.shape_cast %27 : vector<1x32x128xf32> to vector<32x128xf32>
      %cst = arith.constant 0.000000e+00 : f32
      %29 = vector.shape_cast %25 : vector<1x128xi1> to vector<1x128xi1>
      %30 = vector.broadcast %29 : vector<1x128xi1> to vector<32x128xi1>
      %31 = vector.broadcast %cst : f32 to vector<32x128xf32>
      %32 = arith.select %30, %28, %31 : vector<32x128xi1>, vector<32x128xf32>
      %33 = arith.index_cast %c0_i32_8 : i32 to index
      %c0_11 = arith.constant 0 : index
      %c0_12 = arith.constant 0 : index
      %34 = vector.load %arg10[%33, %c0_11, %c0_12] : memref<1x32x1xf32, #tpu.memory_space<vmem>>, vector<1x32x1xf32>
      %35 = vector.shape_cast %34 : vector<1x32x1xf32> to vector<32x1xf32>
      %cst_13 = arith.constant dense<0.000000e+00> : vector<32xf32>
      %36 = vector.multi_reduction <add>, %32, %cst_13 [1] : vector<32x128xf32> to vector<32xf32>
      %37 = vector.shape_cast %36 : vector<32xf32> to vector<32x1xf32>
      %38 = arith.addf %35, %37 : vector<32x1xf32>
      %39 = arith.index_cast %c0_i32_8 : i32 to index
      %c0_14 = arith.constant 0 : index
      %c0_15 = arith.constant 0 : index
      %40 = vector.load %arg10[%39, %c0_14, %c0_15] : memref<1x32x1xf32, #tpu.memory_space<vmem>>, vector<1x32x1xf32>
      %41 = vector.shape_cast %40 : vector<1x32x1xf32> to vector<32x1xf32>
      %42 = vector.shape_cast %38 : vector<32x1xf32> to vector<1x32x1xf32>
      tpu.vector_store %arg10[%39, %c0_14, %c0_15], %42 {strides = array<i32>} : memref<1x32x1xf32, #tpu.memory_space<vmem>>, vector<1x32x1xf32>,
      %43 = arith.index_cast %c0_i32_8 : i32 to index
      %c0_16 = arith.constant 0 : index
      %c0_17 = arith.constant 0 : index
      %44 = vector.load %arg11[%43, %c0_16, %c0_17] : memref<1x32x1xf32, #tpu.memory_space<vmem>>, vector<1x32x1xf32>
      %45 = vector.shape_cast %44 : vector<1x32x1xf32> to vector<32x1xf32>
      %46 = arith.mulf %32, %32 : vector<32x128xf32>
      %cst_18 = arith.constant dense<0.000000e+00> : vector<32xf32>
      %47 = vector.multi_reduction <add>, %46, %cst_18 [1] : vector<32x128xf32> to vector<32xf32>
      %48 = vector.shape_cast %47 : vector<32xf32> to vector<32x1xf32>
      %49 = arith.addf %45, %48 : vector<32x1xf32>
      %50 = arith.index_cast %c0_i32_8 : i32 to index
      %c0_19 = arith.constant 0 : index
      %c0_20 = arith.constant 0 : index
      %51 = vector.load %arg11[%50, %c0_19, %c0_20] : memref<1x32x1xf32, #tpu.memory_space<vmem>>, vector<1x32x1xf32>
      %52 = vector.shape_cast %51 : vector<1x32x1xf32> to vector<32x1xf32>
      %53 = vector.shape_cast %49 : vector<32x1xf32> to vector<1x32x1xf32>
      tpu.vector_store %arg11[%50, %c0_19, %c0_20], %53 {strides = array<i32>} : memref<1x32x1xf32, #tpu.memory_space<vmem>>, vector<1x32x1xf32>,
      %c1_i32_21 = arith.constant 1 : i32
    } else {
    }
    %c1_i32 = arith.constant 1 : i32
    %12 = arith.cmpi eq, %arg1, %c1_i32 : i32
    %c0_i32_4 = arith.constant 0 : i32
    %13 = arith.cmpi eq, %arg2, %c0_i32_4 : i32
    %14 = arith.andi %12, %13 : i1
    %15 = arith.extui %14 : i1 to i32
    %c0_i32_5 = arith.constant 0 : i32
    %16 = arith.cmpi ne, %15, %c0_i32_5 : i32
    scf.if %16 {
      %c0 = arith.constant 0 : index
      %c0_8 = arith.constant 0 : index
      %20 = vector.load %arg5[%c0, %c0_8] : memref<32x1xf32, #tpu.memory_space<vmem>>, vector<32x1xf32>
      %c0_9 = arith.constant 0 : index
      %c0_10 = arith.constant 0 : index
      %21 = vector.load %arg6[%c0_9, %c0_10] : memref<32x1xf32, #tpu.memory_space<vmem>>, vector<32x1xf32>
      %c0_i32_11 = arith.constant 0 : i32
      %c1_i32_12 = arith.constant 1 : i32
      %22 = arith.muli %arg0, %c1_i32_12 : i32
      %23 = arith.addi %22, %c0_i32_11 : i32
      %24 = arith.index_cast %23 : i32 to index
      %25 = memref.load %arg3[%24] : memref<2xi32, #tpu.memory_space<smem>>
      %c1_i32_13 = arith.constant 1 : i32
      %26 = arith.maxsi %25, %c1_i32_13 : i32
      %27 = arith.sitofp %26 : i32 to f32
      %cst = arith.constant 1.000000e+00 : f32
      %28 = arith.divf %cst, %27 : f32
      %29 = arith.index_cast %c0_i32_11 : i32 to index
      %c0_14 = arith.constant 0 : index
      %c0_15 = arith.constant 0 : index
      %30 = vector.load %arg10[%29, %c0_14, %c0_15] : memref<1x32x1xf32, #tpu.memory_space<vmem>>, vector<1x32x1xf32>
      %31 = vector.shape_cast %30 : vector<1x32x1xf32> to vector<32x1xf32>
      %32 = vector.broadcast %28 : f32 to vector<32x1xf32>
      %33 = arith.mulf %31, %32 : vector<32x1xf32>
      %34 = arith.index_cast %c0_i32_11 : i32 to index
      %c0_16 = arith.constant 0 : index
      %c0_17 = arith.constant 0 : index
      %35 = vector.load %arg11[%34, %c0_16, %c0_17] : memref<1x32x1xf32, #tpu.memory_space<vmem>>, vector<1x32x1xf32>
      %36 = vector.shape_cast %35 : vector<1x32x1xf32> to vector<32x1xf32>
      %37 = vector.broadcast %28 : f32 to vector<32x1xf32>
      %38 = arith.mulf %36, %37 : vector<32x1xf32>
      %39 = arith.mulf %33, %33 : vector<32x1xf32>
      %40 = arith.subf %38, %39 : vector<32x1xf32>
      %cst_18 = arith.constant 9.99999993E-9 : f32
      %41 = vector.broadcast %cst_18 : f32 to vector<32x1xf32>
      %42 = arith.addf %40, %41 : vector<32x1xf32>
      %43 = math.rsqrt %42 : vector<32x1xf32>
      %44 = arith.mulf %43, %20 : vector<32x1xf32>
      %45 = arith.index_cast %c0_i32_11 : i32 to index
      %c0_19 = arith.constant 0 : index
      %c0_20 = arith.constant 0 : index
      %46 = vector.load %arg12[%45, %c0_19, %c0_20] : memref<1x32x1xf32, #tpu.memory_space<vmem>>, vector<1x32x1xf32>
      %47 = vector.shape_cast %46 : vector<1x32x1xf32> to vector<32x1xf32>
      %48 = vector.shape_cast %44 : vector<32x1xf32> to vector<1x32x1xf32>
      tpu.vector_store %arg12[%45, %c0_19, %c0_20], %48 {strides = array<i32>} : memref<1x32x1xf32, #tpu.memory_space<vmem>>, vector<1x32x1xf32>,
      %49 = arith.mulf %33, %44 : vector<32x1xf32>
      %50 = arith.subf %21, %49 : vector<32x1xf32>
      %51 = arith.index_cast %c0_i32_11 : i32 to index
      %c0_21 = arith.constant 0 : index
      %c0_22 = arith.constant 0 : index
      %52 = vector.load %arg13[%51, %c0_21, %c0_22] : memref<1x32x1xf32, #tpu.memory_space<vmem>>, vector<1x32x1xf32>
      %53 = vector.shape_cast %52 : vector<1x32x1xf32> to vector<32x1xf32>
      %54 = vector.shape_cast %50 : vector<32x1xf32> to vector<1x32x1xf32>
      tpu.vector_store %arg13[%51, %c0_21, %c0_22], %54 {strides = array<i32>} : memref<1x32x1xf32, #tpu.memory_space<vmem>>, vector<1x32x1xf32>,
      %c1_i32_23 = arith.constant 1 : i32
    } else {
    }
    %c1_i32_6 = arith.constant 1 : i32
    %17 = arith.cmpi eq, %arg1, %c1_i32_6 : i32
    %18 = arith.extui %17 : i1 to i32
    %c0_i32_7 = arith.constant 0 : i32
    %19 = arith.cmpi ne, %18, %c0_i32_7 : i32
    scf.if %19 {
      %c0 = arith.constant 0 : index
      %c0_8 = arith.constant 0 : index
      %20 = vector.load %arg7[%c0, %c0_8] : memref<16x32xf32, #tpu.memory_space<vmem>>, vector<16x32xf32>
      %c0_9 = arith.constant 0 : index
      %c0_10 = arith.constant 0 : index
      %21 = vector.load %arg8[%c0_9, %c0_10] : memref<16x1xf32, #tpu.memory_space<vmem>>, vector<16x1xf32>
      %c0_i32_11 = arith.constant 0 : i32
      %c1_i32_12 = arith.constant 1 : i32
      %22 = arith.muli %arg0, %c1_i32_12 : i32
      %23 = arith.addi %22, %c0_i32_11 : i32
      %24 = arith.index_cast %23 : i32 to index
      %25 = memref.load %arg3[%24] : memref<2xi32, #tpu.memory_space<smem>>
      %26 = arith.index_cast %c0_i32_11 : i32 to index
      %c0_13 = arith.constant 0 : index
      %c0_14 = arith.constant 0 : index
      %27 = vector.load %arg4[%26, %c0_13, %c0_14] : memref<1x32x128xf32, #tpu.memory_space<vmem>>, vector<1x32x128xf32>
      %28 = vector.shape_cast %27 : vector<1x32x128xf32> to vector<32x128xf32>
      %29 = arith.index_cast %c0_i32_11 : i32 to index
      %c0_15 = arith.constant 0 : index
      %c0_16 = arith.constant 0 : index
      %30 = vector.load %arg12[%29, %c0_15, %c0_16] : memref<1x32x1xf32, #tpu.memory_space<vmem>>, vector<1x32x1xf32>
      %31 = vector.shape_cast %30 : vector<1x32x1xf32> to vector<32x1xf32>
      %32 = vector.broadcast %31 : vector<32x1xf32> to vector<32x128xf32>
      %33 = arith.mulf %28, %32 : vector<32x128xf32>
      %34 = arith.index_cast %c0_i32_11 : i32 to index
      %c0_17 = arith.constant 0 : index
      %c0_18 = arith.constant 0 : index
      %35 = vector.load %arg13[%34, %c0_17, %c0_18] : memref<1x32x1xf32, #tpu.memory_space<vmem>>, vector<1x32x1xf32>
      %36 = vector.shape_cast %35 : vector<1x32x1xf32> to vector<32x1xf32>
      %37 = vector.broadcast %36 : vector<32x1xf32> to vector<32x128xf32>
      %38 = arith.addf %33, %37 : vector<32x128xf32>
      %cst = arith.constant 0.000000e+00 : f32
      %39 = vector.broadcast %cst : f32 to vector<32x128xf32>
      %40 = arith.maximumf %38, %39 : vector<32x128xf32>
      %cst_19 = arith.constant dense<0.000000e+00> : vector<16x128xf32>
      %41 = tpu.matmul %20, %40, %cst_19 {dimension_numbers = #tpu.dot_dimension_numbers<[1], [0], [0], [1], [0, 0, 1, 1], [], []>} : vector<16x32xf32>, vector<32x128xf32>, vector<16x128xf32> -> vector<16x128xf32>
      %42 = vector.broadcast %21 : vector<16x1xf32> to vector<16x128xf32>
      %43 = arith.addf %41, %42 : vector<16x128xf32>
      %44 = vector.broadcast %25 : i32 to vector<1x128xi32>
      %45 = arith.cmpi slt, %3, %44 : vector<1x128xi32>
      %cst_20 = arith.constant 0.000000e+00 : f32
      %46 = vector.shape_cast %45 : vector<1x128xi1> to vector<1x128xi1>
      %47 = vector.broadcast %46 : vector<1x128xi1> to vector<16x128xi1>
      %48 = vector.broadcast %cst_20 : f32 to vector<16x128xf32>
      %49 = arith.select %47, %43, %48 : vector<16x128xi1>, vector<16x128xf32>
      %50 = arith.index_cast %c0_i32_11 : i32 to index
      %c0_21 = arith.constant 0 : index
      %c0_22 = arith.constant 0 : index
      %51 = vector.load %arg9[%50, %c0_21, %c0_22] : memref<1x16x128xf32, #tpu.memory_space<vmem>>, vector<1x16x128xf32>
      %52 = vector.shape_cast %51 : vector<1x16x128xf32> to vector<16x128xf32>
      %53 = vector.shape_cast %49 : vector<16x128xf32> to vector<1x16x128xf32>
      tpu.vector_store %arg9[%50, %c0_21, %c0_22], %53 {strides = array<i32>} : memref<1x16x128xf32, #tpu.memory_space<vmem>>, vector<1x16x128xf32>,
      %c1_i32_23 = arith.constant 1 : i32
    } else {
    }
    return
  }
  func.func @transform_0(%arg0: i32, %arg1: i32, %arg2: i32, %arg3: memref<2xi32, #tpu.memory_space<smem>>) -> (i32, i32, i32) {
    %c0_i32 = arith.constant 0 : i32
    %c0_i32_0 = arith.constant 0 : i32
    return %arg0, %c0_i32, %arg2 : i32, i32, i32
  }
  func.func @transform_1(%arg0: i32, %arg1: i32, %arg2: i32, %arg3: memref<2xi32, #tpu.memory_space<smem>>) -> (i32, i32) {
    %c0_i32 = arith.constant 0 : i32
    %c0_i32_0 = arith.constant 0 : i32
    %c0_i32_1 = arith.constant 0 : i32
    return %c0_i32, %c0_i32_0 : i32, i32
  }
  func.func @transform_2(%arg0: i32, %arg1: i32, %arg2: i32, %arg3: memref<2xi32, #tpu.memory_space<smem>>) -> (i32, i32) {
    %c0_i32 = arith.constant 0 : i32
    %c0_i32_0 = arith.constant 0 : i32
    %c0_i32_1 = arith.constant 0 : i32
    return %c0_i32, %c0_i32_0 : i32, i32
  }
  func.func @transform_3(%arg0: i32, %arg1: i32, %arg2: i32, %arg3: memref<2xi32, #tpu.memory_space<smem>>) -> (i32, i32) {
    %c0_i32 = arith.constant 0 : i32
    %c0_i32_0 = arith.constant 0 : i32
    %c0_i32_1 = arith.constant 0 : i32
    return %c0_i32, %c0_i32_0 : i32, i32
  }
  func.func @transform_4(%arg0: i32, %arg1: i32, %arg2: i32, %arg3: memref<2xi32, #tpu.memory_space<smem>>) -> (i32, i32) {
    %c0_i32 = arith.constant 0 : i32
    %c0_i32_0 = arith.constant 0 : i32
    %c0_i32_1 = arith.constant 0 : i32
    return %c0_i32, %c0_i32_0 : i32, i32
  }
  func.func @transform_5(%arg0: i32, %arg1: i32, %arg2: i32, %arg3: memref<2xi32, #tpu.memory_space<smem>>) -> (i32, i32, i32) {
    %0 = arith.muli %arg1, %arg2 : i32
    %c0_i32 = arith.constant 0 : i32
    %c0_i32_0 = arith.constant 0 : i32
    return %arg0, %c0_i32, %0 : i32, i32, i32
  }
}

</mosaic_0001>

<llo_original>
// kernel: tpu_custom_call.1
$region0: #{tpu_custom_call.1}
  #allocation0 [shape = 'u32[]', space=smem, size = 0x4, offset = 0x4, fixed_abs, tag = 'smem constant byte address 0x4 - core index']
  #allocation1 [shape = 'u32[144,128]{1,0:T(1,128)}', space=vmem, size = 0x12000, scoped, tag = 'internal scratch']
  #allocation2 [shape = 'f32[1,32,1]{2,1,0:T(8,128)}', space=vmem, size = 0x4000, scoped, tag = 'scratch operand']
  #allocation3 [shape = 'f32[1,32,1]{2,1,0:T(8,128)}', space=vmem, size = 0x4000, scoped, tag = 'scratch operand']
  #allocation4 [shape = 'f32[1,32,1]{2,1,0:T(8,128)}', space=vmem, size = 0x4000, scoped, tag = 'scratch operand']
  #allocation5 [shape = 'f32[1,32,1]{2,1,0:T(8,128)}', space=vmem, size = 0x4000, scoped, tag = 'scratch operand']
  #allocation6 [shape = 's32[1]{0}', space=sflag, size = 0x4, scoped, tag = 'scoped memory for tpu_custom_call.1']
  #allocation7 [shape = 'u8[512]{0}', space=smem, size = 0x200, scoped, tag = 'prefetched SMEM operand 0']
  %s0 = inlined_call_operand.vmem [shape: s32[2], index: 0, kind: input, shape index: {}]
  %s1 = inlined_call_operand.hbm [shape: f32[2,32,256], index: 1, kind: input, shape index: {}]
  %s2 = inlined_call_operand.vmem [shape: f32[32,1], index: 2, kind: input, shape index: {}]
  %s3 = inlined_call_operand.vmem [shape: f32[32,1], index: 3, kind: input, shape index: {}]
  %s4 = inlined_call_operand.vmem [shape: f32[16,32], index: 4, kind: input, shape index: {}]
  %s5 = inlined_call_operand.vmem [shape: f32[16,1], index: 5, kind: input, shape index: {}]
  %s6 = inlined_call_operand.hbm [shape: f32[2,16,256], index: 6, kind: output, shape index: {}]
  %s7 = sld [smem:[#allocation0]]
  $region73: #{tpu_custom_call.1} parent=0
    _
  %s9 = ssub.s32 1, %s7
  %s10 = scalar_select 0, %s9, %s7
  %s11 = sshll.u32 %s0, 4
  %s12 = int_to_ptr.vmem [resolvable:$true] %s11
  %14 = dma.vmem_to_smem %s12, 16, [#allocation7], [#allocation6]
  %15 = dma.done [#allocation6], 16
  %16 = sfence
  $region1: #{tpu_custom_call.1} parent=0
    #allocation8 [shape = 'u8[32768]{0}', space=vmem, size = 0x8000, scoped, tag = 'input window, operand 1']
    #allocation9 [shape = 's32[2]{0}', space=sflag, size = 0x8, scoped, tag = 'scoped memory for tpu_custom_call.1']
    #allocation10 [shape = 's32[2]{0}', space=sflag, size = 0x8, scoped, tag = 'scoped memory for tpu_custom_call.1']
    #allocation11 [shape = 'u8[16384]{0}', space=vmem, size = 0x4000, scoped, tag = 'output window, operand 0']
    %17 = vsyncpa [#allocation9], 0
    %s18 = scalar_lea.sflag [#allocation9], 1
    %19 = vsyncpa %s18, 0
    %20 = vsyncpa [#allocation10], 0
    %s21 = scalar_lea.sflag [#allocation10], 1
    %22 = vsyncpa %s21, 0
    loop: start=0, step=1, limit=10
    $region2: #{tpu_custom_call.1} parent=1 // loop_pre_header
      _
    $region3: #{tpu_custom_call.1} parent=1 // loop_header
      %s24 = sphi 0, %s28
      %p25 = scmp.ge.s32.totalorder %s24, 10
      %s31 = sphi 0, %s50
      %s32 = sphi 0, %s46
      %s33 = sphi 0, %s42
      %s34 = sphi 0, %s31
      %s35 = sphi 0, %s32
      %s36 = sphi 0, %s33
      %s37 = sphi 0, %s34
      %s38 = sphi 0, %s35
      %s39 = sphi 0, %s36
      %s55 = sphi 0, %s57
      %s58 = sphi 0, %s55
      %s59 = sphi 0, %s58
      %s75 = sphi 0, %s59
      %s79 = sphi 0, %s79
      %s81 = sphi 0, %s79
      %s82 = sphi 0, %s81
      %s96 = sphi 0, %s82
      %s100 = sphi 0, %s100
      %s102 = sphi 0, %s100
      %s103 = sphi 0, %s102
      %s117 = sphi 0, %s103
      %s121 = sphi 0, %s121
      %s123 = sphi 0, %s121
      %s124 = sphi 0, %s123
      %s138 = sphi 0, %s124
      %s142 = sphi 0, %s142
      %s144 = sphi 0, %s142
      %s145 = sphi 0, %s144
      %s159 = sphi 0, %s145
      %s169 = sphi 0, %s171
      %s172 = sphi 0, %s169
      %s173 = sphi 0, %s172
      %s189 = sphi 0, %s173
    $region4: #{tpu_custom_call.1} parent=1 // loop_header_branch
      %27 = sbr.rel (%p25) target = $region8
    $region5: #{tpu_custom_call.1} parent=1 // loop_body
      %s29 = ssub.s32 %s24, 1
      %s30 = ssub.s32 %s24, 2
      %s40 = sadd.s32 1, %s33
      %p41 = scmp.ge.s32.totalorder %s40, 2
      %s42 = scalar_select %p41, 0, %s40
      %s43 = sadd.s32 1, %s32
      %s44 = scalar_select %p41, %s43, %s32
      %p45 = scmp.ge.s32.totalorder %s44, 2
      %s46 = scalar_select %p45, 0, %s44
      %s47 = sadd.s32 1, %s31
      %s48 = scalar_select %p45, %s47, %s31
      %p49 = scmp.ge.s32.totalorder %s48, 2
      %s50 = scalar_select %p49, 0, %s48
      %s51 = ssub.s32 %s31, %s50
      %s52 = ssub.s32 %s33, %s42
      %s53 = sor.u32 %s51, %s52
      %p54 = scmp.eq.s32.totalorder %s53, 0
      %s56 = sadd.s32 %s55, 1
      %s57 = scalar_select %p54, %s55, %s56
      %p60 = pneg %p54
      %p61 = scmp.eq.s32.totalorder %s24, 7
      %p62 = por %p60, %p61
      %p63 = scmp.ne.s32.totalorder %s55, %s58
      %p64 = scmp.eq.s32.totalorder %s24, 0
      %p65 = por %p63, %p64
      %p66 = scmp.ne.s32.totalorder %s55, %s58
      %p67 = scmp.eq.s32.totalorder %s29, 7
      %p68 = por %p66, %p67
      %p69 = scmp.ne.s32.totalorder %s58, %s59
      %p70 = scmp.eq.s32.totalorder %s29, 0
      %p71 = por %p69, %p70
      %p72 = scmp.ne.s32.totalorder %s58, %s59
      %p73 = scmp.eq.s32.totalorder %s30, 7
      %p74 = por %p72, %p73
      %p76 = scmp.ne.s32.totalorder %s59, %s75
      %p77 = scmp.eq.s32.totalorder %s30, 0
      %p78 = por %p76, %p77
      %s80 = sadd.s32 %s79, 1
      %p83 = scmp.eq.s32.totalorder %s24, 7
      %p84 = scmp.ne.s32.totalorder %s79, %s81
      %p85 = scmp.eq.s32.totalorder %s24, 0
      %p86 = por %p84, %p85
      %p87 = scmp.ne.s32.totalorder %s79, %s81
      %p88 = scmp.eq.s32.totalorder %s29, 7
      %p89 = por %p87, %p88
      %p90 = scmp.ne.s32.totalorder %s81, %s82
      %p91 = scmp.eq.s32.totalorder %s29, 0
      %p92 = por %p90, %p91
      %p93 = scmp.ne.s32.totalorder %s81, %s82
      %p94 = scmp.eq.s32.totalorder %s30, 7
      %p95 = por %p93, %p94
      %p97 = scmp.ne.s32.totalorder %s82, %s96
      %p98 = scmp.eq.s32.totalorder %s30, 0
      %p99 = por %p97, %p98
      %s101 = sadd.s32 %s100, 1
      %p104 = scmp.eq.s32.totalorder %s24, 7
      %p105 = scmp.ne.s32.totalorder %s100, %s102
      %p106 = scmp.eq.s32.totalorder %s24, 0
      %p107 = por %p105, %p106
      %p108 = scmp.ne.s32.totalorder %s100, %s102
      %p109 = scmp.eq.s32.totalorder %s29, 7
      %p110 = por %p108, %p109
      %p111 = scmp.ne.s32.totalorder %s102, %s103
      %p112 = scmp.eq.s32.totalorder %s29, 0
      %p113 = por %p111, %p112
      %p114 = scmp.ne.s32.totalorder %s102, %s103
      %p115 = scmp.eq.s32.totalorder %s30, 7
      %p116 = por %p114, %p115
      %p118 = scmp.ne.s32.totalorder %s103, %s117
      %p119 = scmp.eq.s32.totalorder %s30, 0
      %p120 = por %p118, %p119
      %s122 = sadd.s32 %s121, 1
      %p125 = scmp.eq.s32.totalorder %s24, 7
      %p126 = scmp.ne.s32.totalorder %s121, %s123
      %p127 = scmp.eq.s32.totalorder %s24, 0
      %p128 = por %p126, %p127
      %p129 = scmp.ne.s32.totalorder %s121, %s123
      %p130 = scmp.eq.s32.totalorder %s29, 7
      %p131 = por %p129, %p130
      %p132 = scmp.ne.s32.totalorder %s123, %s124
      %p133 = scmp.eq.s32.totalorder %s29, 0
      %p134 = por %p132, %p133
      %p135 = scmp.ne.s32.totalorder %s123, %s124
      %p136 = scmp.eq.s32.totalorder %s30, 7
      %p137 = por %p135, %p136
      %p139 = scmp.ne.s32.totalorder %s124, %s138
      %p140 = scmp.eq.s32.totalorder %s30, 0
      %p141 = por %p139, %p140
      %s143 = sadd.s32 %s142, 1
      %p146 = scmp.eq.s32.totalorder %s24, 7
      %p147 = scmp.ne.s32.totalorder %s142, %s144
      %p148 = scmp.eq.s32.totalorder %s24, 0
      %p149 = por %p147, %p148
      %p150 = scmp.ne.s32.totalorder %s142, %s144
      %p151 = scmp.eq.s32.totalorder %s29, 7
      %p152 = por %p150, %p151
      %p153 = scmp.ne.s32.totalorder %s144, %s145
      %p154 = scmp.eq.s32.totalorder %s29, 0
      %p155 = por %p153, %p154
      %p156 = scmp.ne.s32.totalorder %s144, %s145
      %p157 = scmp.eq.s32.totalorder %s30, 7
      %p158 = por %p156, %p157
      %p160 = scmp.ne.s32.totalorder %s145, %s159
      %p161 = scmp.eq.s32.totalorder %s30, 0
      %p162 = por %p160, %p161
      %s163 = smul.u32 %s32, %s33
      %s164 = smul.u32 %s46, %s42
      %s165 = ssub.s32 %s31, %s50
      %s166 = ssub.s32 %s163, %s164
      %s167 = sor.u32 %s165, %s166
      %p168 = scmp.eq.s32.totalorder %s167, 0
      %s170 = sadd.s32 %s169, 1
      %s171 = scalar_select %p168, %s169, %s170
      %p174 = pneg %p168
      %p175 = scmp.eq.s32.totalorder %s24, 7
      %p176 = por %p174, %p175
      %p177 = scmp.ne.s32.totalorder %s169, %s172
      %p178 = scmp.eq.s32.totalorder %s24, 0
      %p179 = por %p177, %p178
      %p180 = scmp.ne.s32.totalorder %s169, %s172
      %p181 = scmp.eq.s32.totalorder %s29, 7
      %p182 = por %p180, %p181
      %p183 = scmp.ne.s32.totalorder %s172, %s173
      %p184 = scmp.eq.s32.totalorder %s29, 0
      %p185 = por %p183, %p184
      %p186 = scmp.ne.s32.totalorder %s172, %s173
      %p187 = scmp.eq.s32.totalorder %s30, 7
      %p188 = por %p186, %p187
      %p190 = scmp.ne.s32.totalorder %s173, %s189
      %p191 = scmp.eq.s32.totalorder %s30, 0
      %p192 = por %p190, %p191
      %p193 = scmp.le.s32.totalorder 1, %s24
      %p194 = scmp.lt.s32.totalorder %s24, 9
      %p195 = pnand %p193, %p194
      %p196 = pneg %p195
      // Predicated region
      $region9: #{tpu_custom_call.1} parent=5 // pred_check
        _
      $region10: #{tpu_custom_call.1} parent=5 // pred_check_branch
        %198 = sbr.rel (%p195) target = $region12
      $region11: #{tpu_custom_call.1} parent=5 // pred_region
        %s199 = ssub.s32 %s24, 1
        // Predicated region
        $region13: #{tpu_custom_call.1} parent=11 // pred_check
          %p200 = pneg %p92
        $region14: #{tpu_custom_call.1} parent=11 // pred_check_branch
          %202 = sbr.rel (%p200) target = $region16
        $region15: #{tpu_custom_call.1} parent=11 // pred_region
          _
        $region16: #{tpu_custom_call.1} parent=11 // pred_fallthru
          _
        // Predicated region
        $region17: #{tpu_custom_call.1} parent=11 // pred_check
          %p203 = pneg %p113
        $region18: #{tpu_custom_call.1} parent=11 // pred_check_branch
          %205 = sbr.rel (%p203) target = $region20
        $region19: #{tpu_custom_call.1} parent=11 // pred_region
          _
        $region20: #{tpu_custom_call.1} parent=11 // pred_fallthru
          _
        // Predicated region
        $region21: #{tpu_custom_call.1} parent=11 // pred_check
          %p206 = pneg %p134
        $region22: #{tpu_custom_call.1} parent=11 // pred_check_branch
          %208 = sbr.rel (%p206) target = $region24
        $region23: #{tpu_custom_call.1} parent=11 // pred_region
          _
        $region24: #{tpu_custom_call.1} parent=11 // pred_fallthru
          _
        // Predicated region
        $region25: #{tpu_custom_call.1} parent=11 // pred_check
          %p209 = pneg %p155
        $region26: #{tpu_custom_call.1} parent=11 // pred_check_branch
          %211 = sbr.rel (%p209) target = $region28
        $region27: #{tpu_custom_call.1} parent=11 // pred_region
          _
        $region28: #{tpu_custom_call.1} parent=11 // pred_fallthru
          _
      $region12: #{tpu_custom_call.1} parent=5 // pred_fallthru
        _
      %p212 = scmp.lt.s32.totalorder %s24, 8
      // Predicated region
      $region29: #{tpu_custom_call.1} parent=5 // pred_check
        %p213 = pneg %p212
      $region30: #{tpu_custom_call.1} parent=5 // pred_check_branch
        %215 = sbr.rel (%p213) target = $region32
      $region31: #{tpu_custom_call.1} parent=5 // pred_region
        // Predicated region
        $region33: #{tpu_custom_call.1} parent=31 // pred_check
          %p216 = pneg %p65
        $region34: #{tpu_custom_call.1} parent=31 // pred_check_branch
          %218 = sbr.rel (%p216) target = $region36
        $region35: #{tpu_custom_call.1} parent=31 // pred_region
          %s219 = sand.u32 %s55, 1
          %s220 = scalar_lea.sflag [#allocation9], %s219
          %s221 = sand.u32 %s55, 1
          %s222 = smul.addr %s221, 32
          %s223 = scalar_lea.vmem [#allocation8], %s222
          %s225 = ssub.s32 512, 512
          %226 = vsyncadd %s220, %s225
          %s227 = smul.addr %s31, 8
          %s228 = sadd.s32 %s33, %s227
          %s229 = smul.addr %s228, 128
          %s230 = scalar_lea.hbm %s1, %s229
          %s231 = sshll.u32 %s223, 4
          %s232 = int_to_ptr.vmem [resolvable:$true] %s231
          %237 = dma.hbm_to_vmem [thread:$0]  %s230, 512, %s232, %s220, 256, 128, 8
        $region36: #{tpu_custom_call.1} parent=31 // pred_fallthru
          _
      $region32: #{tpu_custom_call.1} parent=5 // pred_fallthru
        _
      %p238 = scmp.le.s32.totalorder 1, %s24
      %p239 = scmp.lt.s32.totalorder %s24, 9
      %p240 = pnand %p238, %p239
      %p241 = pneg %p240
      // Predicated region
      $region37: #{tpu_custom_call.1} parent=5 // pred_check
        _
      $region38: #{tpu_custom_call.1} parent=5 // pred_check_branch
        %243 = sbr.rel (%p240) target = $region40
      $region39: #{tpu_custom_call.1} parent=5 // pred_region
        %s244 = ssub.s32 %s24, 1
        %s245 = sand.u32 %s58, 1
        %s246 = scalar_lea.sflag [#allocation9], %s245
        %s247 = sand.u32 %s58, 1
        %s248 = smul.addr %s247, 32
        %s249 = scalar_lea.vmem [#allocation8], %s248
        // Predicated region
        $region41: #{tpu_custom_call.1} parent=39 // pred_check
          %p250 = pneg %p71
        $region42: #{tpu_custom_call.1} parent=39 // pred_check_branch
          %252 = sbr.rel (%p250) target = $region44
        $region43: #{tpu_custom_call.1} parent=39 // pred_region
          %253 = dma.done %s246, 512
        $region44: #{tpu_custom_call.1} parent=39 // pred_fallthru
          _
        %s254 = sand.u32 %s58, 1
        %s255 = scalar_lea.sflag [#allocation9], %s254
        %s256 = sand.u32 %s58, 1
        %s257 = smul.addr %s256, 32
        %s258 = scalar_lea.vmem [#allocation8], %s257
        %p259 = pneg %p71
        %p260 = pneg %p68
        %p261 = pneg %p92
        %p262 = pneg %p89
        %p263 = pneg %p113
        %p264 = pneg %p110
        %p265 = pneg %p134
        %p266 = pneg %p131
        %p267 = pneg %p155
        %p268 = pneg %p152
        %p269 = pneg %p185
        %p270 = pneg %p182
        %s271 = sand.u32 %s172, 1
        %s272 = scalar_lea.sflag [#allocation10], %s271
        %s273 = sand.u32 %s172, 1
        %s274 = smul.addr %s273, 16
        %s275 = scalar_lea.vmem [#allocation11], %s274
        %s276 = smul.u32 %s35, %s36
        %v277 = vlaneseq
        %v278 = vand.u32 %v277, 127
        %s279 = smul.u32 %s36, 128
        %v280 = vstv %s279
        %v281 = vadd.s32 %v278, %v280
        %p282 = scmp.eq.s32.totalorder %s35, 0
        %p283 = scmp.eq.s32.totalorder %s36, 0
        %p284 = pnand %p282, %p283
        %p285 = pneg %p284
        // Predicated region
        $region45: #{tpu_custom_call.1} parent=39 // pred_check
          _
        $region46: #{tpu_custom_call.1} parent=39 // pred_check_branch
          %287 = sbr.rel (%p284) target = $region48
        $region47: #{tpu_custom_call.1} parent=39 // pred_region
          %vm288 = vcmask 7168
          %289 = vst.msk [vmem:[#allocation2] sm:$0xff] %vm288, 0.0
          %290 = vst.msk [vmem:[#allocation2 + $0x8] sm:$0xff] %vm288, 0.0
          %291 = vst.msk [vmem:[#allocation2 + $0x10] sm:$0xff] %vm288, 0.0
          %292 = vst.msk [vmem:[#allocation2 + $0x18] sm:$0xff] %vm288, 0.0
          %293 = vst.msk [vmem:[#allocation3] sm:$0xff] %vm288, 0.0
          %294 = vst.msk [vmem:[#allocation3 + $0x8] sm:$0xff] %vm288, 0.0
          %295 = vst.msk [vmem:[#allocation3 + $0x10] sm:$0xff] %vm288, 0.0
          %296 = vst.msk [vmem:[#allocation3 + $0x18] sm:$0xff] %vm288, 0.0
        $region48: #{tpu_custom_call.1} parent=39 // pred_fallthru
          _
        // Predicated region
        $region49: #{tpu_custom_call.1} parent=39 // pred_check
          %p297 = pneg %p282
        $region50: #{tpu_custom_call.1} parent=39 // pred_check_branch
          %299 = sbr.rel (%p297) target = $region52
        $region51: #{tpu_custom_call.1} parent=39 // pred_region
          %s300 = sld [smem:[#allocation7 + %s34]]
          %v301 = vstv %s300
          %vm302 = vcmp.lt.s32.totalorder %v281, %v301
          %v303 = vld [vmem:[%s249] sm:$0xff]
          %v304 = vld [vmem:[%s249 + $0x8] sm:$0xff]
          %v305 = vld [vmem:[%s249 + $0x10] sm:$0xff]
          %v306 = vld [vmem:[%s249 + $0x18] sm:$0xff]
          %v307 = vsel %vm302, 1, 0
          %vm308 = vcmp.eq.s32.totalorder %v307, 1
          %v309 = vsel %vm308, %v303, 0.0
          %v310 = vsel %vm308, %v304, 0.0
          %v311 = vsel %vm308, %v305, 0.0
          %v312 = vsel %vm308, %v306, 0.0
          %v313 = vld [vmem:[#allocation2] sm:$0xff]
          %v314 = vld [vmem:[#allocation2 + $0x8] sm:$0xff]
          %v315 = vld [vmem:[#allocation2 + $0x10] sm:$0xff]
          %v316 = vld [vmem:[#allocation2 + $0x18] sm:$0xff]
          %317 = vadd.xlane.f32.xlu0 %v309
          %v318 = vpop.xlane.xlu0 %317
          %319 = vadd.xlane.f32.xlu0 %v310
          %v320 = vpop.xlane.xlu0 %319
          %321 = vadd.xlane.f32.xlu0 %v311
          %v322 = vpop.xlane.xlu0 %321
          %323 = vadd.xlane.f32.xlu0 %v312
          %v324 = vpop.xlane.xlu0 %323
          %v325 = vadd.f32 %v313, %v318
          %v326 = vadd.f32 %v314, %v320
          %v327 = vadd.f32 %v315, %v322
          %v328 = vadd.f32 %v316, %v324
          %vm329 = vcmask 7168
          %330 = vst.msk [vmem:[#allocation2] sm:$0xff] %vm329, %v325
          %331 = vst.msk [vmem:[#allocation2 + $0x8] sm:$0xff] %vm329, %v326
          %332 = vst.msk [vmem:[#allocation2 + $0x10] sm:$0xff] %vm329, %v327
          %333 = vst.msk [vmem:[#allocation2 + $0x18] sm:$0xff] %vm329, %v328
          %v334 = vld [vmem:[#allocation3] sm:$0xff]
          %v335 = vld [vmem:[#allocation3 + $0x8] sm:$0xff]
          %v336 = vld [vmem:[#allocation3 + $0x10] sm:$0xff]
          %v337 = vld [vmem:[#allocation3 + $0x18] sm:$0xff]
          %v338 = vmul.f32 %v309, %v309
          %v339 = vmul.f32 %v310, %v310
          %v340 = vmul.f32 %v311, %v311
          %v341 = vmul.f32 %v312, %v312
          %342 = vadd.xlane.f32.xlu0 %v338
          %v343 = vpop.xlane.xlu0 %342
          %344 = vadd.xlane.f32.xlu0 %v339
          %v345 = vpop.xlane.xlu0 %344
          %346 = vadd.xlane.f32.xlu0 %v340
          %v347 = vpop.xlane.xlu0 %346
          %348 = vadd.xlane.f32.xlu0 %v341
          %v349 = vpop.xlane.xlu0 %348
          %v350 = vadd.f32 %v334, %v343
          %v351 = vadd.f32 %v335, %v345
          %v352 = vadd.f32 %v336, %v347
          %v353 = vadd.f32 %v337, %v349
          %354 = vst.msk [vmem:[#allocation3] sm:$0xff] %vm329, %v350
          %355 = vst.msk [vmem:[#allocation3 + $0x8] sm:$0xff] %vm329, %v351
          %356 = vst.msk [vmem:[#allocation3 + $0x10] sm:$0xff] %vm329, %v352
          %357 = vst.msk [vmem:[#allocation3 + $0x18] sm:$0xff] %vm329, %v353
        $region52: #{tpu_custom_call.1} parent=39 // pred_fallthru
          _
        %p358 = scmp.eq.s32.totalorder %s35, 1
        %p359 = pnand %p358, %p283
        %p360 = pneg %p359
        // Predicated region
        $region53: #{tpu_custom_call.1} parent=39 // pred_check
          _
        $region54: #{tpu_custom_call.1} parent=39 // pred_check_branch
          %362 = sbr.rel (%p359) target = $region56
        $region55: #{tpu_custom_call.1} parent=39 // pred_region
          %v363 = vld [vmem:[%s2] sm:$0xff]
          %v364 = vld [vmem:[%s2 + $0x8] sm:$0xff]
          %v365 = vld [vmem:[%s2 + $0x10] sm:$0xff]
          %v366 = vld [vmem:[%s2 + $0x18] sm:$0xff]
          %v367 = vld [vmem:[%s3] sm:$0xff]
          %v368 = vld [vmem:[%s3 + $0x8] sm:$0xff]
          %v369 = vld [vmem:[%s3 + $0x10] sm:$0xff]
          %v370 = vld [vmem:[%s3 + $0x18] sm:$0xff]
          %s371 = sld [smem:[#allocation7 + %s34]]
          %p372 = scmp.gt.s32.totalorder %s371, 1
          %s373 = scalar_select %p372, %s371, 1
          %s374 = scvt.s32.f32 %s373
          %v375 = vstv %s374
          %v376 = vrcp.pop %v375
          %s377 = vtos %v376
          %v378 = vld [vmem:[#allocation2] sm:$0xff]
          %v379 = vld [vmem:[#allocation2 + $0x8] sm:$0xff]
          %v380 = vld [vmem:[#allocation2 + $0x10] sm:$0xff]
          %v381 = vld [vmem:[#allocation2 + $0x18] sm:$0xff]
          %v382 = vstv %s377
          %v383 = vmul.f32 %v378, %v382
          %v384 = vmul.f32 %v379, %v382
          %v385 = vmul.f32 %v380, %v382
          %v386 = vmul.f32 %v381, %v382
          %v387 = vld [vmem:[#allocation3] sm:$0xff]
          %v388 = vld [vmem:[#allocation3 + $0x8] sm:$0xff]
          %v389 = vld [vmem:[#allocation3 + $0x10] sm:$0xff]
          %v390 = vld [vmem:[#allocation3 + $0x18] sm:$0xff]
          %v391 = vmul.f32 %v387, %v382
          %v392 = vmul.f32 %v388, %v382
          %v393 = vmul.f32 %v389, %v382
          %v394 = vmul.f32 %v390, %v382
          %v395 = vmul.f32 %v383, %v383
          %v396 = vmul.f32 %v384, %v384
          %v397 = vmul.f32 %v385, %v385
          %v398 = vmul.f32 %v386, %v386
          %v399 = vsub.f32 %v391, %v395
          %v400 = vsub.f32 %v392, %v396
          %v401 = vsub.f32 %v393, %v397
          %v402 = vsub.f32 %v394, %v398
          %v403 = vadd.f32 %v399, 1e-08
          %v404 = vadd.f32 %v400, 1e-08
          %v405 = vadd.f32 %v401, 1e-08
          %v406 = vadd.f32 %v402, 1e-08
          %v407 = vrsqrt.pop %v403
          %v408 = vrsqrt.pop %v404
          %v409 = vrsqrt.pop %v405
          %v410 = vrsqrt.pop %v406
          %v411 = vmul.f32 %v407, %v363
          %v412 = vmul.f32 %v408, %v364
          %v413 = vmul.f32 %v409, %v365
          %v414 = vmul.f32 %v410, %v366
          %vm415 = vcmask 7168
          %416 = vst.msk [vmem:[#allocation4] sm:$0xff] %vm415, %v411
          %417 = vst.msk [vmem:[#allocation4 + $0x8] sm:$0xff] %vm415, %v412
          %418 = vst.msk [vmem:[#allocation4 + $0x10] sm:$0xff] %vm415, %v413
          %419 = vst.msk [vmem:[#allocation4 + $0x18] sm:$0xff] %vm415, %v414
          %v420 = vmul.f32 %v383, %v411
          %v421 = vmul.f32 %v384, %v412
          %v422 = vmul.f32 %v385, %v413
          %v423 = vmul.f32 %v386, %v414
          %v424 = vsub.f32 %v367, %v420
          %v425 = vsub.f32 %v368, %v421
          %v426 = vsub.f32 %v369, %v422
          %v427 = vsub.f32 %v370, %v423
          %428 = vst.msk [vmem:[#allocation5] sm:$0xff] %vm415, %v424
          %429 = vst.msk [vmem:[#allocation5 + $0x8] sm:$0xff] %vm415, %v425
          %430 = vst.msk [vmem:[#allocation5 + $0x10] sm:$0xff] %vm415, %v426
          %431 = vst.msk [vmem:[#allocation5 + $0x18] sm:$0xff] %vm415, %v427
        $region56: #{tpu_custom_call.1} parent=39 // pred_fallthru
          _
        // Predicated region
        $region57: #{tpu_custom_call.1} parent=39 // pred_check
          %p432 = pneg %p358
        $region58: #{tpu_custom_call.1} parent=39 // pred_check_branch
          %434 = sbr.rel (%p432) target = $region60
        $region59: #{tpu_custom_call.1} parent=39 // pred_region
          %v435 = vld [vmem:[%s4] sm:$0xff]
          %v436 = vld [vmem:[%s4 + $0x8] sm:$0xff]
          %v437 = vld [vmem:[%s5] sm:$0xff]
          %v438 = vld [vmem:[%s5 + $0x8] sm:$0xff]
          %s439 = sld [smem:[#allocation7 + %s34]]
          %v440 = vld [vmem:[%s249] sm:$0xff]
          %v441 = vld [vmem:[%s249 + $0x8] sm:$0xff]
          %v442 = vld [vmem:[%s249 + $0x10] sm:$0xff]
          %v443 = vld [vmem:[%s249 + $0x18] sm:$0xff]
          %v444 = vld [vmem:[#allocation4] sm:$0xff]
          %v445 = vld [vmem:[#allocation4 + $0x8] sm:$0xff]
          %v446 = vld [vmem:[#allocation4 + $0x10] sm:$0xff]
          %v447 = vld [vmem:[#allocation4 + $0x18] sm:$0xff]
          %449 = vset.pattern.permute.xlu0 0
          %450 = vperm.xlu0 %449, %v444
          %v451 = vpop.permute.xlu0 %450
          %454 = vset.pattern.permute.xlu0 0
          %455 = vperm.xlu0 %454, %v445
          %v456 = vpop.permute.xlu0 %455
          %459 = vset.pattern.permute.xlu0 0
          %460 = vperm.xlu0 %459, %v446
          %v461 = vpop.permute.xlu0 %460
          %464 = vset.pattern.permute.xlu0 0
          %465 = vperm.xlu0 %464, %v447
          %v466 = vpop.permute.xlu0 %465
          %v468 = vmul.f32 %v440, %v451
          %v469 = vmul.f32 %v441, %v456
          %v470 = vmul.f32 %v442, %v461
          %v471 = vmul.f32 %v443, %v466
          %v472 = vld [vmem:[#allocation5] sm:$0xff]
          %v473 = vld [vmem:[#allocation5 + $0x8] sm:$0xff]
          %v474 = vld [vmem:[#allocation5 + $0x10] sm:$0xff]
          %v475 = vld [vmem:[#allocation5 + $0x18] sm:$0xff]
          %477 = vset.pattern.permute.xlu0 0
          %478 = vperm.xlu0 %477, %v472
          %v479 = vpop.permute.xlu0 %478
          %482 = vset.pattern.permute.xlu0 0
          %483 = vperm.xlu0 %482, %v473
          %v484 = vpop.permute.xlu0 %483
          %487 = vset.pattern.permute.xlu0 0
          %488 = vperm.xlu0 %487, %v474
          %v489 = vpop.permute.xlu0 %488
          %492 = vset.pattern.permute.xlu0 0
          %493 = vperm.xlu0 %492, %v475
          %v494 = vpop.permute.xlu0 %493
          %v496 = vadd.f32 %v468, %v479
          %v497 = vadd.f32 %v469, %v484
          %v498 = vadd.f32 %v470, %v489
          %v499 = vadd.f32 %v471, %v494
          %v500 = vmax.f32 %v496, 0.0
          %v501 = vmax.f32 %v497, 0.0
          %v502 = vmax.f32 %v498, 0.0
          %v503 = vmax.f32 %v499, 0.0
          %505 = vset.pattern.permute.xlu0 0
          %506 = vperm.xlu0 %505, %v437
          %v507 = vpop.permute.xlu0 %506
          %510 = vset.pattern.permute.xlu0 0
          %511 = vperm.xlu0 %510, %v438
          %v512 = vpop.permute.xlu0 %511
          %vm514 = vcmask 261120
          %v516 = vsel %vm514, %v435, 0
          %v519 = vsel %vm514, %v436, 0
          %521 = vmatprep.subr.mxu0 0.0
          %522 = vmatpush1.msra.mxu0 %v500
          %523 = vmatprep.subr.mxu0 0.0
          %524 = vmatpush1.msra.mxu0 %v501
          %525 = vmatprep.subr.mxu0 0.0
          %526 = vmatpush1.msra.mxu0 %v502
          %527 = vmatprep.subr.mxu0 0.0
          %528 = vmatpush1.msra.mxu0 %v503
          %529 = vmatprep.subr.mxu0 0.0
          %530 = vmatpush1.msra.mxu0 0.0
          %531 = vmatprep.subr.mxu0 0.0
          %532 = vmatpush1.msra.mxu0 0.0
          %533 = vmatprep.subr.mxu0 0.0
          %534 = vmatpush1.msra.mxu0 0.0
          %535 = vmatprep.subr.mxu0 0.0
          %536 = vmatpush1.msra.mxu0 0.0
          %537 = vmatprep.subr.mxu0 0.0
          %538 = vmatpush1.msra.mxu0 0.0
          %539 = vmatprep.subr.mxu0 0.0
          %540 = vmatpush1.msra.mxu0 0.0
          %541 = vmatprep.subr.mxu0 0.0
          %542 = vmatpush1.msra.mxu0 0.0
          %543 = vmatprep.subr.mxu0 0.0
          %544 = vmatpush1.msra.mxu0 0.0
          %545 = vmatprep.subr.mxu0 0.0
          %546 = vmatpush1.msra.mxu0 0.0
          %547 = vmatprep.subr.mxu0 0.0
          %548 = vmatpush1.msra.mxu0 0.0
          %549 = vmatprep.subr.mxu0 0.0
          %550 = vmatpush1.msra.mxu0 0.0
          %551 = vmatprep.subr.mxu0 0.0
          %552 = vmatpush1.msra.mxu0 0.0
          %553 = vmatprep.subr.mxu0 0.0
          %554 = vmatpush1.msra.mxu0 0.0
          %555 = vmatprep.subr.mxu0 0.0
          %556 = vmatpush1.msra.mxu0 0.0
          %557 = vmatprep.subr.mxu0 0.0
          %558 = vmatpush1.msra.mxu0 0.0
          %559 = vmatprep.subr.mxu0 0.0
          %560 = vmatpush1.msra.mxu0 0.0
          %561 = vmatprep.subr.mxu0 0.0
          %562 = vmatpush1.msra.mxu0 0.0
          %563 = vmatprep.subr.mxu0 0.0
          %564 = vmatpush1.msra.mxu0 0.0
          %565 = vmatprep.subr.mxu0 0.0
          %566 = vmatpush1.msra.mxu0 0.0
          %567 = vmatprep.subr.mxu0 0.0
          %568 = vmatpush1.msra.mxu0 0.0
          %569 = vmatprep.subr.mxu0 0.0
          %570 = vmatpush1.msra.mxu0 0.0
          %571 = vmatprep.subr.mxu0 0.0
          %572 = vmatpush1.msra.mxu0 0.0
          %573 = vmatprep.subr.mxu0 0.0
          %574 = vmatpush1.msra.mxu0 0.0
          %575 = vmatprep.subr.mxu0 0.0
          %576 = vmatpush1.msra.mxu0 0.0
          %577 = vmatprep.subr.mxu0 0.0
          %578 = vmatpush1.msra.mxu0 0.0
          %579 = vmatprep.subr.mxu0 0.0
          %580 = vmatpush1.msra.mxu0 0.0
          %581 = vmatprep.subr.mxu0 0.0
          %582 = vmatpush1.msra.mxu0 0.0
          %583 = vmatprep.subr.mxu0 0.0
          %584 = vmatpush1.msra.mxu0 0.0
          %585 = vmatprep.mubr.f32.mxu0 0.0
          %586 = vmatmul.mubr.f32.gmra.mrb[0].mxu0 %v516
          %v587 = vpop.f32.mrb[0].mxu0
          %v588 = vadd.f32 %v507, %v587
          %v589 = vpop.f32.mrb[0].mxu0
          %590 = vmatprep.mubr.f32.mxu0 0.0
          %591 = vmatmul.mubr.f32.gmra.mrb[0].mxu0 %v519
          %v592 = vpop.f32.mrb[0].mxu0
          %v593 = vadd.f32 %v512, %v592
          %v594 = vpop.f32.mrb[0].mxu0
          %595 = vdwg.mxu0
          %v596 = vstv %s439
          %vm597 = vcmp.lt.s32.totalorder %v281, %v596
          %v598 = vsel %vm597, 1, 0
          %vm599 = vcmp.eq.s32.totalorder %v598, 1
          %v600 = vsel %vm599, %v588, 0.0
          %v601 = vsel %vm599, %v593, 0.0
          %602 = vst [vmem:[%s275] sm:$0xff] %v600
          %603 = vst [vmem:[%s275 + $0x8] sm:$0xff] %v601
        $region60: #{tpu_custom_call.1} parent=39 // pred_fallthru
          _
        %s604 = sand.u32 %s172, 1
        %s605 = scalar_lea.sflag [#allocation10], %s604
        %s606 = sand.u32 %s172, 1
        %s607 = smul.addr %s606, 16
        %s608 = scalar_lea.vmem [#allocation11], %s607
        // Predicated region
        $region61: #{tpu_custom_call.1} parent=39 // pred_check
          %p609 = pneg %p182
        $region62: #{tpu_custom_call.1} parent=39 // pred_check_branch
          %611 = sbr.rel (%p609) target = $region64
        $region63: #{tpu_custom_call.1} parent=39 // pred_region
          %s612 = smul.u32 %s35, %s36
          %s614 = ssub.s32 256, 256
          %615 = vsyncadd %s605, %s614
          %s616 = smul.addr %s34, 4
          %s617 = sadd.s32 %s612, %s616
          %s618 = smul.addr %s617, 128
          %s619 = scalar_lea.hbm %s6, %s618
          %s620 = sshll.u32 %s608, 4
          %s621 = int_to_ptr.vmem [resolvable:$true] %s620
          %626 = dma.vmem_to_hbm [thread:$0]  %s621, 256, %s619, %s605, 128, 256, 8
        $region64: #{tpu_custom_call.1} parent=39 // pred_fallthru
          _
      $region40: #{tpu_custom_call.1} parent=5 // pred_fallthru
        _
      %p627 = scmp.le.s32.totalorder 2, %s24
      // Predicated region
      $region65: #{tpu_custom_call.1} parent=5 // pred_check
        %p628 = pneg %p627
      $region66: #{tpu_custom_call.1} parent=5 // pred_check_branch
        %630 = sbr.rel (%p628) target = $region68
      $region67: #{tpu_custom_call.1} parent=5 // pred_region
        %s631 = ssub.s32 %s24, 2
        // Predicated region
        $region69: #{tpu_custom_call.1} parent=67 // pred_check
          %p632 = pneg %p188
        $region70: #{tpu_custom_call.1} parent=67 // pred_check_branch
          %634 = sbr.rel (%p632) target = $region72
        $region71: #{tpu_custom_call.1} parent=67 // pred_region
          %s635 = sand.u32 %s173, 1
          %s636 = scalar_lea.sflag [#allocation10], %s635
          %s637 = sand.u32 %s173, 1
          %s638 = smul.addr %s637, 16
          %s639 = scalar_lea.vmem [#allocation11], %s638
          %640 = dma.done %s636, 256
        $region72: #{tpu_custom_call.1} parent=67 // pred_fallthru
          _
      $region68: #{tpu_custom_call.1} parent=5 // pred_fallthru
        _
    $region6: #{tpu_custom_call.1} parent=1 // loop_footer
      %s28 = sadd.s32 1, %s24
    $region7: #{tpu_custom_call.1} parent=1 // loop_footer_branch
      %23 = sbr.rel target = $region3
    $region8: #{tpu_custom_call.1} parent=1 // loop_exit
      _
    %641 = vsyncpa [#allocation9], 1
    %s642 = scalar_lea.sflag [#allocation9], 1
    %643 = vsyncpa %s642, 1
    %644 = vsyncpa [#allocation10], 1
    %s645 = scalar_lea.sflag [#allocation10], 1
    %646 = vsyncpa %s645, 1

</llo_original>
